<compile_context>
chip_gen: v5e
topology: v5e:2x2
jax: 0.10.0
libtpu: 0.0.40
codegen_flags: <defaults>
</compile_context>

<pallas_src>
import jax
import jax.numpy as jnp
from jax.experimental import pallas as pl
from jax.experimental.pallas import tpu as pltpu


_MAX_TM = 2048                         # cap rows per tile
_VMEM_DATA_BUDGET = 40 * 1024 * 1024   # per-TC budget for kernel buffers
_VMEM_LIMIT_CAP = 56 * 1024 * 1024     # stay under v7x's 64 MiB physical VMEM


def _round_up(x, m):
    return (x + m - 1) // m * m


# ---------------------------------------------------------------------------
# Kernels
# ---------------------------------------------------------------------------
def _encoder_kernel(x_ref, w_ref, b_ref, o_ref):
    """Full-K path. x (TM, R); w (R, H) pre-transposed; b (1, H); o (TM, H)."""
    acc = jax.lax.dot_general(
        x_ref[...].astype(w_ref.dtype),            # bf16 operands -> fast MXU
        w_ref[...],
        dimension_numbers=(((1,), (0,)), ((), ())),
        preferred_element_type=jnp.float32,        # f32 accumulation
    )
    acc = acc + b_ref[...]                         # f32 bias-add (VPU)
    o_ref[...] = jnp.tanh(acc).astype(o_ref.dtype)  # f32 tanh (EUP)


def _encoder_kernel_ktiled(x_ref, w_ref, b_ref, o_ref, acc_ref):
    """K-tiled path: accumulate (TM, H) partials over the last grid axis."""
    k = pl.program_id(1)

    @pl.when(k == 0)
    def _init():
        acc_ref[...] = jnp.zeros_like(acc_ref)

    acc_ref[...] += jax.lax.dot_general(
        x_ref[...].astype(w_ref.dtype),
        w_ref[...],
        dimension_numbers=(((1,), (0,)), ((), ())),
        preferred_element_type=jnp.float32,
    )

    @pl.when(k == pl.num_programs(1) - 1)
    def _finalize():
        o_ref[...] = jnp.tanh(acc_ref[...] + b_ref[...]).astype(o_ref.dtype)


# ---------------------------------------------------------------------------
# Tiling selection
# ---------------------------------------------------------------------------
def _pick_tiles(M, R, H, x_bytes, w_bytes, out_bytes):
    """Return (TM, TK). TK is None when the full (R, H) weight stays resident."""
    budget = _VMEM_DATA_BUDGET

    # Full-K path: double-buffered x/out row streams + resident weight/bias.
    # The grid-invariant weight/bias blocks are conservatively counted twice
    # (Pallas allocates double buffers even though it never re-fetches them).
    resident = 2 * (R * H * w_bytes + H * 4)
    per_row = 2 * (R * x_bytes + H * out_bytes)
    if budget > resident and (budget - resident) // per_row >= 8:
        tm = int(min((budget - resident) // per_row, _MAX_TM))
        if M >= 1024:                        # keep both v7x TCs busy
            tm = min(tm, _round_up(pl.cdiv(M, 2), 8))
        tm = max(8, tm // 8 * 8)
        return min(tm, M), None

    # K-tiled path for large R (resident weight would blow the VMEM budget).
    tk = next((t for t in (2048, 1024, 512, 256, 128) if R % t == 0), R)
    resident = 2 * (tk * H * w_bytes + H * 4)
    per_row = 2 * (tk * x_bytes + H * out_bytes) + H * 4  # + f32 accumulator
    avail = max(budget - resident, per_row * 8)
    tm = int(min(avail // per_row, _MAX_TM))
    if M >= 1024:
        tm = min(tm, max(8, _round_up(pl.cdiv(M, 2), 8)))
    tm = max(8, tm // 8 * 8)
    return min(tm, M), tk


# ---------------------------------------------------------------------------
# Parameter prep + forward
# ---------------------------------------------------------------------------
def prepare_encoder_params(weight, bias, param_dtype=jnp.bfloat16):
    """One-time parameter prep (outside the hot path).

    weight: PyTorch-layout (H, R); bias: (H,).
    Returns w_t: (R, H) in param_dtype (bf16 by default: halves weight DMA,
    fast MXU path) and b: (1, H) float32 (bias-add + tanh stay f32 in-kernel).
    """
    H, R = weight.shape
    w_t = jnp.asarray(weight).T.astype(param_dtype)            # (R, H)
    b = jnp.asarray(bias).reshape(1, H).astype(jnp.float32)    # (1, H)
    return w_t, b


@jax.jit
def encoder_forward(x, w_t, b):
    """x: (B, S, R); w_t: (R, H) pre-transposed; b: (1, H) f32 -> (B, S, H)."""
    B, S, R = x.shape
    Rw, H = w_t.shape
    assert Rw == R, "weight must be pre-transposed to (rnn_size, hidden_size)"
    M = B * S
    x2d = x.reshape(M, R)
    out_dtype = x.dtype

    x_bytes = x.dtype.itemsize
    w_bytes = w_t.dtype.itemsize
    out_bytes = jnp.dtype(out_dtype).itemsize

    tm, tk = _pick_tiles(M, R, H, x_bytes, w_bytes, out_bytes)
    grid_m = pl.cdiv(M, tm)

    cost = pl.CostEstimate(
        flops=2 * M * R * H,
        transcendentals=M * H,
        bytes_accessed=(M * R * x_bytes + R * H * w_bytes
                        + H * 4 + M * H * out_bytes),
    )

    if tk is None:
        # Full-K: streamed row tiles, resident (R, H) weight + bias.
        used = 2 * tm * (R * x_bytes + H * out_bytes) + 2 * (R * H * w_bytes + H * 4)
        grid = (grid_m,)
        in_specs = [
            pl.BlockSpec((tm, R), lambda i: (i, 0)),   # streamed row tile
            pl.BlockSpec((R, H), lambda i: (0, 0)),    # resident weight
            pl.BlockSpec((1, H), lambda i: (0, 0)),    # resident bias
        ]
        out_specs = pl.BlockSpec((tm, H), lambda i: (i, 0))
        scratch_shapes = []
        kernel = _encoder_kernel
        dim_sem = ("parallel",)
    else:
        # K-tiled: weight streamed in (TK, H) slabs, f32 accumulator scratch.
        grid_k = pl.cdiv(R, tk)
        used = (2 * tm * (tk * x_bytes + H * out_bytes)
                + 2 * (tk * H * w_bytes + H * 4) + tm * H * 4)
        grid = (grid_m, grid_k)
        in_specs = [
            pl.BlockSpec((tm, tk), lambda i, k: (i, k)),
            pl.BlockSpec((tk, H), lambda i, k: (k, 0)),
            pl.BlockSpec((1, H), lambda i, k: (0, 0)),
        ]
        out_specs = pl.BlockSpec((tm, H), lambda i, k: (i, 0))
        scratch_shapes = [pltpu.VMEM((tm, H), jnp.float32)]
        kernel = _encoder_kernel_ktiled
        dim_sem = ("parallel", "arbitrary")

    vmem_limit = int(min(max(used + (4 << 20), 32 << 20), _VMEM_LIMIT_CAP))

    out = pl.pallas_call(
        kernel,
        out_shape=jax.ShapeDtypeStruct((M, H), out_dtype),
        grid_spec=pltpu.PrefetchScalarGridSpec(
            num_scalar_prefetch=0,
            grid=grid,
            in_specs=in_specs,
            out_specs=out_specs,
            scratch_shapes=scratch_shapes,
        ),
        compiler_params=pltpu.CompilerParams(
            dimension_semantics=dim_sem,
            vmem_limit_bytes=vmem_limit,
        ),
        cost_estimate=cost,
    )(x2d, w_t, b)

    # No slice needed: the kernel wrote the true (M, H) output directly.
    return out.reshape(B, S, H)


def _xavier_normal(key, shape):
    # nn.init.xavier_normal for a Linear weight of shape (fan_out, fan_in)
    fan_out, fan_in = shape
    std = (2.0 / (fan_in + fan_out)) ** 0.5
    return std * jax.random.normal(key, shape, dtype=jnp.float32)


if __name__ == "__main__":
    # Hyper-params consistent with the module: rnn_size -> hidden_size
    batch, seq = 2, 8
    rnn_size, hidden_size = 32, 64

    key = jax.random.PRNGKey(0)
    kx, kw, kb = jax.random.split(key, 3)

    x = jax.random.normal(kx, (batch, seq, rnn_size), dtype=jnp.float32)
    weight = _xavier_normal(kw, (hidden_size, rnn_size))    # PyTorch (out, in)
    bound = 1.0 / (rnn_size ** 0.5)
    bias = jax.random.uniform(kb, (hidden_size,), dtype=jnp.float32,
                              minval=-bound, maxval=bound)

    # One-time parameter prep (outside the hot path): transpose + bf16 cast.
    w_t, b2d = prepare_encoder_params(weight, bias)

    y = encoder_forward(x, w_t, b2d)
    y = jax.block_until_ready(y)
    assert y.shape == (batch, seq, hidden_size)

    # Matched-precision reference (same bf16 operands, f32 accumulation):
    # validates the kernel itself to tight tolerance.
    ref_match = jnp.tanh(
        jax.lax.dot_general(
            x.reshape(-1, rnn_size).astype(w_t.dtype), w_t,
            dimension_numbers=(((1,), (0,)), ((), ())),
            preferred_element_type=jnp.float32,
        ) + b2d
    ).reshape(batch, seq, hidden_size)
    assert jnp.allclose(y, ref_match, atol=1e-5), \
        "mismatch vs matched-precision reference"

    # Loose check against the pure-f32 PyTorch math (difference is only the
    # bf16 weight/activation quantization; tanh output is in [-1, 1]).
    ref_f32 = jnp.tanh(x @ weight.T + bias)
    assert jnp.allclose(y, ref_f32, atol=5e-2), "mismatch vs f32 reference"

    print("KERNEL_OK")
</pallas_src>

<mosaic_0001>
module attributes {stable_mosaic.version = 11 : i64} {
  func.func @_encoder_kernel(%arg0: i32, %arg1: memref<16x32xf32, #tpu.memory_space<vmem>>, %arg2: memref<32x64xbf16, #tpu.memory_space<vmem>>, %arg3: memref<1x64xf32, #tpu.memory_space<vmem>>, %arg4: memref<16x64xf32, #tpu.memory_space<vmem>>) attributes {dimension_semantics = [#tpu.dimension_semantics<parallel>], iteration_bounds = array<i64: 1>, scalar_prefetch = 0 : i64, scratch_operands = 0 : i64, tpu.core_type = #tpu.core_type<tc>, window_params = [{transform_indices = @transform_0, window_bounds = array<i64: 16, 32>}, {pipeline_mode = #tpu.pipeline_mode<synchronous>, transform_indices = @transform_1, window_bounds = array<i64: 32, 64>}, {pipeline_mode = #tpu.pipeline_mode<synchronous>, transform_indices = @transform_2, window_bounds = array<i64: 1, 64>}, {transform_indices = @transform_3, window_bounds = array<i64: 16, 64>}]} {
    %c0 = arith.constant 0 : index
    %c0_0 = arith.constant 0 : index
    %0 = vector.load %arg1[%c0, %c0_0] : memref<16x32xf32, #tpu.memory_space<vmem>>, vector<16x32xf32>
    %1 = arith.truncf %0 : vector<16x32xf32> to vector<16x32xbf16>
    %c0_1 = arith.constant 0 : index
    %c0_2 = arith.constant 0 : index
    %2 = vector.load %arg2[%c0_1, %c0_2] : memref<32x64xbf16, #tpu.memory_space<vmem>>, vector<32x64xbf16>
    %cst = arith.constant dense<0.000000e+00> : vector<16x64xf32>
    %3 = tpu.matmul %1, %2, %cst {dimension_numbers = #tpu.dot_dimension_numbers<[1], [0], [0], [1], [0, 0, 1, 1], [], []>} : vector<16x32xbf16>, vector<32x64xbf16>, vector<16x64xf32> -> vector<16x64xf32>
    %c0_3 = arith.constant 0 : index
    %c0_4 = arith.constant 0 : index
    %4 = vector.load %arg3[%c0_3, %c0_4] : memref<1x64xf32, #tpu.memory_space<vmem>>, vector<1x64xf32>
    %5 = vector.broadcast %4 : vector<1x64xf32> to vector<16x64xf32>
    %6 = arith.addf %3, %5 : vector<16x64xf32>
    %7 = math.tanh %6 : vector<16x64xf32>
    %c0_5 = arith.constant 0 : index
    %c0_6 = arith.constant 0 : index
    %8 = vector.load %arg4[%c0_5, %c0_6] : memref<16x64xf32, #tpu.memory_space<vmem>>, vector<16x64xf32>
    tpu.vector_store %arg4[%c0_5, %c0_6], %7 {strides = array<i32>} : memref<16x64xf32, #tpu.memory_space<vmem>>, vector<16x64xf32>,
    return
  }
  func.func @transform_0(%arg0: i32) -> (i32, i32) {
    %c0_i32 = arith.constant 0 : i32
    %c0_i32_0 = arith.constant 0 : i32
    return %arg0, %c0_i32 : i32, i32
  }
  func.func @transform_1(%arg0: i32) -> (i32, i32) {
    %c0_i32 = arith.constant 0 : i32
    %c0_i32_0 = arith.constant 0 : i32
    %c0_i32_1 = arith.constant 0 : i32
    return %c0_i32, %c0_i32_0 : i32, i32
  }
  func.func @transform_2(%arg0: i32) -> (i32, i32) {
    %c0_i32 = arith.constant 0 : i32
    %c0_i32_0 = arith.constant 0 : i32
    %c0_i32_1 = arith.constant 0 : i32
    return %c0_i32, %c0_i32_0 : i32, i32
  }
  func.func @transform_3(%arg0: i32) -> (i32, i32) {
    %c0_i32 = arith.constant 0 : i32
    %c0_i32_0 = arith.constant 0 : i32
    return %arg0, %c0_i32 : i32, i32
  }
}

</mosaic_0001>

<llo_original>
// kernel: encoder_forward.1
$region0: #{encoder_forward.1}
  #allocation0 [shape = 'u32[]', space=smem, size = 0x4, offset = 0x4, fixed_abs, tag = 'smem constant byte address 0x4 - core index']
  #allocation1 [shape = 'u32[72,128]{1,0:T(1,128)}', space=vmem, size = 0x9000, scoped, tag = 'internal scratch']
  %s0 = inlined_call_operand.hbm [shape: f32[16,32], index: 0, kind: input, shape index: {}]
  %s1 = inlined_call_operand.hbm [shape: bf16[32,64], index: 1, kind: input, shape index: {}]
  %s2 = inlined_call_operand.vmem [shape: f32[1,64], index: 2, kind: input, shape index: {}]
  %s3 = inlined_call_operand.hbm [shape: f32[16,64], index: 3, kind: output, shape index: {}]
  %s4 = sld [smem:[#allocation0]]
  $region30: #{encoder_forward.1} parent=0
    _
  %s6 = ssub.s32 1, %s4
  %s7 = scalar_select 0, %s6, %s4
  $region1: #{encoder_forward.1} parent=0
    #allocation2 [shape = 'u8[8192]{0}', space=vmem, size = 0x2000, scoped, tag = 'input window, operand 0, single buffered']
    #allocation3 [shape = 's32[1]{0}', space=sflag, size = 0x4, scoped, tag = 'scoped memory for encoder_forward.1']
    #allocation4 [shape = 's32[1]{0}', space=sflag, size = 0x4, scoped, tag = 'scoped memory for encoder_forward.1']
    #allocation5 [shape = 'u8[8192]{0}', space=vmem, size = 0x2000, scoped, tag = 'input window, operand 1, single buffered']
    #allocation6 [shape = 's32[1]{0}', space=sflag, size = 0x4, scoped, tag = 'scoped memory for encoder_forward.1']
    #allocation7 [shape = 'u8[8192]{0}', space=vmem, size = 0x2000, scoped, tag = 'output window, operand 0, single buffered']
    %8 = vsyncpa [#allocation3], 0
    %9 = vsyncpa [#allocation6], 0
    %10 = vsyncpa [#allocation4], 0
    // Predicated region
    $region2: #{encoder_forward.1} parent=1 // pred_check
      _
    $region3: #{encoder_forward.1} parent=1 // pred_check_branch
      %12 = sbr.rel (0) target = $region5
    $region4: #{encoder_forward.1} parent=1 // pred_region
      %14 = vsyncadd [#allocation3], 0
      %s15 = sshll.u32 %s0, 4
      %s16 = int_to_ptr.hbm [resolvable:$true] %s15
      %s17 = sshll.u32 [#allocation2], 4
      %s18 = int_to_ptr.vmem [resolvable:$true] %s17
      %23 = dma.hbm_to_vmem [thread:$0]  %s16, 256, %s18, [#allocation3], 128, 128, 8
    $region5: #{encoder_forward.1} parent=1 // pred_fallthru
      _
    // Predicated region
    $region6: #{encoder_forward.1} parent=1 // pred_check
      _
    $region7: #{encoder_forward.1} parent=1 // pred_check_branch
      %25 = sbr.rel (0) target = $region9
    $region8: #{encoder_forward.1} parent=1 // pred_region
      %27 = vsyncadd [#allocation6], 0
      %s28 = sshll.u32 %s1, 4
      %s29 = int_to_ptr.hbm [resolvable:$true] %s28
      %s30 = sshll.u32 [#allocation5], 4
      %s31 = int_to_ptr.vmem [resolvable:$true] %s30
      %36 = dma.hbm_to_vmem [thread:$0]  %s29, 256, %s31, [#allocation6], 64, 64, 4
    $region9: #{encoder_forward.1} parent=1 // pred_fallthru
      _
    // Predicated region
    $region10: #{encoder_forward.1} parent=1 // pred_check
      _
    $region11: #{encoder_forward.1} parent=1 // pred_check_branch
      %38 = sbr.rel (0) target = $region13
    $region12: #{encoder_forward.1} parent=1 // pred_region
      _
    $region13: #{encoder_forward.1} parent=1 // pred_fallthru
      _
    // Predicated region
    $region14: #{encoder_forward.1} parent=1 // pred_check
      _
    $region15: #{encoder_forward.1} parent=1 // pred_check_branch
      %40 = sbr.rel (0) target = $region17
    $region16: #{encoder_forward.1} parent=1 // pred_region
      %42 = dma.done [#allocation3], 256
    $region17: #{encoder_forward.1} parent=1 // pred_fallthru
      _
    // Predicated region
    $region18: #{encoder_forward.1} parent=1 // pred_check
      _
    $region19: #{encoder_forward.1} parent=1 // pred_check_branch
      %44 = sbr.rel (0) target = $region21
    $region20: #{encoder_forward.1} parent=1 // pred_region
      %46 = dma.done [#allocation6], 256
    $region21: #{encoder_forward.1} parent=1 // pred_fallthru
      _
    %v48 = vld [vmem:[#allocation2] sm:$0xff]
    %v49 = vld [vmem:[#allocation2 + $0x8] sm:$0xff]
    %v50 = vpack.c.bf16 %v49, %v48
    %v51 = vld [vmem:[#allocation5] sm:$0xf]
    %v52 = vld [vmem:[#allocation5 + $0x4] sm:$0xf]
    %v53 = vld [vmem:[#allocation5 + $0x8] sm:$0xf]
    %v54 = vld [vmem:[#allocation5 + $0xc] sm:$0xf]
    %v55 = vld [vmem:[%s2] sm:$0x1]
    %v57 = vperm.slane %v55, 0
    %v63 = vunpack.c.l.b16 %v51
    %v64 = vunpack.c.l.b16 %v52
    %v65 = vunpack.c.l.b16 %v53
    %v66 = vunpack.c.l.b16 %v54
    %v67 = vpack.c.b16 %v64, %v63
    %v68 = vpack.c.b16 %v66, %v65
    %vm71 = vcmask 261120
    %v73 = vsel %vm71, %v50, 0
    %75 = vmatpush.bf16.msra.mxu0 0
    %76 = vmatpush.bf16.msra.mxu0 0
    %77 = vmatpush.bf16.msra.mxu0 0
    %78 = vmatpush.bf16.msra.mxu0 0
    %79 = vmatpush.bf16.msra.mxu0 0
    %80 = vmatpush.bf16.msra.mxu0 0
    %81 = vmatpush.bf16.msra.mxu0 %v68
    %82 = vmatpush.bf16.msra.mxu0 %v67
    %83 = vmatmul.bf16.gmra.mxu0 %v73
    %v84 = vpop.f32.mrf.mxu0
    %v85 = vadd.f32 %v57, %v84
    %v86 = vpop.f32.mrf.mxu0
    %v87 = vadd.f32 %v57, %v86
    %88 = vdwg.mxu0
    %v89 = vtanh.pop %v85
    %v90 = vtanh.pop %v87
    %vm91 = vcmask 523264
    %92 = vst.msk [vmem:[#allocation7] sm:$0xff] %vm91, %v89
    %93 = vst.msk [vmem:[#allocation7 + $0x8] sm:$0xff] %vm91, %v90
    // Predicated region
    $region22: #{encoder_forward.1} parent=1 // pred_check
      _
    $region23: #{encoder_forward.1} parent=1 // pred_check_branch
      %95 = sbr.rel (0) target = $region25
    $region24: #{encoder_forward.1} parent=1 // pred_region
      %97 = vsyncadd [#allocation4], 0
      %s98 = sshll.u32 [#allocation7], 4
      %s99 = int_to_ptr.vmem [resolvable:$true] %s98
      %s100 = sshll.u32 %s3, 4
      %s101 = int_to_ptr.hbm [resolvable:$true] %s100
      %106 = dma.vmem_to_hbm [thread:$0]  %s99, 256, %s101, [#allocation4], 128, 128, 8
    $region25: #{encoder_forward.1} parent=1 // pred_fallthru
      _
    // Predicated region
    $region26: #{encoder_forward.1} parent=1 // pred_check
      _
    $region27: #{encoder_forward.1} parent=1 // pred_check_branch
      %108 = sbr.rel (0) target = $region29
    $region28: #{encoder_forward.1} parent=1 // pred_region
      %110 = dma.done [#allocation4], 256
    $region29: #{encoder_forward.1} parent=1 // pred_fallthru
      _
    %111 = vsyncpa [#allocation3], 1
    %112 = vsyncpa [#allocation6], 1
    %113 = vsyncpa [#allocation4], 1

</llo_original>
